<compile_context>
chip_gen: v7x
topology: tpu7x:2x2x1
jax: 0.10.0
libtpu: 0.0.40
codegen_flags: <defaults>
</compile_context>

<pallas_src>
import functools

import jax
import jax.numpy as jnp
from jax.experimental import pallas as pl
from jax.experimental.pallas import tpu as pltpu


_TARGET_BLOCK_BYTES = 4 * 1024 * 1024  # ~4 MiB per grid step
_LANE_CHOICES = (4096, 2048, 1024, 512, 256, 128)


def _scale_kernel(x_ref, o_ref, *, alpha: float):
    # Pure VPU elementwise scale; alpha is a compile-time constant.
    o_ref[...] = (x_ref[...].astype(jnp.float32) * jnp.float32(alpha)).astype(
        o_ref.dtype
    )


def _scale_2d(x2d: jax.Array, alpha: float) -> jax.Array:
    """Run the Pallas scale kernel on a (rows, lane) slab; lane % 128 == 0."""
    rows, lane = x2d.shape
    dtype = x2d.dtype
    itemsize = jnp.dtype(dtype).itemsize

    # Pick a block of ~4 MiB. If the whole slab is smaller than that, take it in
    # one block (block dim == full array dim is always legal); otherwise use a
    # multiple of 8 sublanes.
    target_rows = max(8, _TARGET_BLOCK_BYTES // (lane * itemsize))
    if rows <= target_rows:
        block_rows = rows
    else:
        block_rows = (target_rows // 8) * 8

    grid = (pl.cdiv(rows, block_rows),)

    return pl.pallas_call(
        functools.partial(_scale_kernel, alpha=alpha),
        out_shape=jax.ShapeDtypeStruct((rows, lane), dtype),
        grid=grid,
        in_specs=[pl.BlockSpec((block_rows, lane), lambda i: (i, 0))],
        out_specs=pl.BlockSpec((block_rows, lane), lambda i: (i, 0)),
        compiler_params=pltpu.CompilerParams(
            dimension_semantics=("parallel",),
        ),
    )(x2d)


def momentum_net_side(inp: jax.Array, alpha: float) -> jax.Array:
    """Forward of MomentumNetSide: out = inp * alpha."""
    orig_shape = inp.shape
    orig_dtype = inp.dtype
    alpha = float(alpha)

    flat = inp.reshape(-1)  # metadata-only reshape, no HBM copy
    n = flat.shape[0]
    if n == 0:
        return inp

    lane = next((l for l in _LANE_CHOICES if n % l == 0), None)

    if lane is None:
        # Ragged size: kernel the 128-aligned bulk, scale the tiny tail in XLA.
        lane = 128
        bulk = (n // lane) * lane
        tail = (flat[bulk:].astype(jnp.float32) * jnp.float32(alpha)).astype(
            orig_dtype
        )
        if bulk == 0:
            return tail.reshape(orig_shape)
        head = _scale_2d(flat[:bulk].reshape(bulk // lane, lane), alpha)
        return jnp.concatenate([head.reshape(-1), tail]).reshape(orig_shape)

    out2d = _scale_2d(flat.reshape(n // lane, lane), alpha)
    return out2d.reshape(orig_shape)


if __name__ == "__main__":
    key = jax.random.PRNGKey(0)
    alpha = 0.7  # e.g. (1 - beta) scaling of the residual stream

    # Primary check: small NCHW residual-stream tensor (no-pad fast path).
    x = jax.random.normal(key, (2, 4, 16, 16), dtype=jnp.float32)
    out = jax.block_until_ready(momentum_net_side(x, alpha))
    ref = x * alpha
    assert out.shape == x.shape and out.dtype == x.dtype
    assert jnp.allclose(out, ref, atol=1e-6, rtol=1e-6)

    # Multi-row lane-dense slab path.
    k2 = jax.random.fold_in(key, 1)
    x2 = jax.random.normal(k2, (4, 16, 56, 56), dtype=jnp.float32)
    out2 = jax.block_until_ready(momentum_net_side(x2, alpha))
    assert jnp.allclose(out2, x2 * alpha, atol=1e-6, rtol=1e-6)

    # bf16 input: multiply happens in f32 like PyTorch's scalar multiply.
    x3 = jax.random.normal(k2, (2, 4, 16, 16), dtype=jnp.bfloat16)
    out3 = jax.block_until_ready(momentum_net_side(x3, alpha))
    ref3 = (x3.astype(jnp.float32) * alpha).astype(jnp.bfloat16)
    assert out3.dtype == jnp.bfloat16 and jnp.array_equal(out3, ref3)

    # Ragged size (not a multiple of 128): bulk kernel + tiny XLA tail.
    x4 = jax.random.normal(k2, (3, 130), dtype=jnp.float32)
    out4 = jax.block_until_ready(momentum_net_side(x4, alpha))
    assert jnp.allclose(out4, x4 * alpha, atol=1e-6, rtol=1e-6)

    print("KERNEL_OK")
</pallas_src>

<mosaic_0001>
module attributes {stable_mosaic.version = 11 : i64} {
  func.func @_scale_kernel(%arg0: i32, %arg1: memref<1x2048xf32, #tpu.memory_space<vmem>>, %arg2: memref<1x2048xf32, #tpu.memory_space<vmem>>) attributes {dimension_semantics = [#tpu.dimension_semantics<parallel>], iteration_bounds = array<i64: 1>, scalar_prefetch = 0 : i64, scratch_operands = 0 : i64, tpu.core_type = #tpu.core_type<tc>, window_params = [{transform_indices = @transform_0, window_bounds = array<i64: 1, 2048>}, {transform_indices = @transform_1, window_bounds = array<i64: 1, 2048>}]} {
    %c0 = arith.constant 0 : index
    %c0_0 = arith.constant 0 : index
    %0 = vector.load %arg1[%c0, %c0_0] : memref<1x2048xf32, #tpu.memory_space<vmem>>, vector<1x2048xf32>
    %cst = arith.constant 0.699999988 : f32
    %1 = vector.broadcast %cst : f32 to vector<1x2048xf32>
    %2 = arith.mulf %0, %1 : vector<1x2048xf32>
    %c0_1 = arith.constant 0 : index
    %c0_2 = arith.constant 0 : index
    %3 = vector.load %arg2[%c0_1, %c0_2] : memref<1x2048xf32, #tpu.memory_space<vmem>>, vector<1x2048xf32>
    tpu.vector_store %arg2[%c0_1, %c0_2], %2 {strides = array<i32>} : memref<1x2048xf32, #tpu.memory_space<vmem>>, vector<1x2048xf32>,
    return
  }
  func.func @transform_0(%arg0: i32) -> (i32, i32) {
    %c0_i32 = arith.constant 0 : i32
    %c0_i32_0 = arith.constant 0 : i32
    return %arg0, %c0_i32 : i32, i32
  }
  func.func @transform_1(%arg0: i32) -> (i32, i32) {
    %c0_i32 = arith.constant 0 : i32
    %c0_i32_0 = arith.constant 0 : i32
    return %arg0, %c0_i32 : i32, i32
  }
}

</mosaic_0001>

<llo_original>
// kernel: tpu_custom_call.1
$region0: #{tpu_custom_call.1}
  #allocation0 [shape = 'u32[]', space=smem, size = 0x4, offset = 0x4, fixed_abs, tag = 'smem constant byte address 0x4 - core index']
  #allocation1 [shape = 'u32[144,128]{1,0:T(1,128)}', space=vmem, size = 0x12000, scoped, tag = 'internal scratch']
  %s0 = inlined_call_operand.hbm [shape: f32[1,2048], index: 0, kind: input, shape index: {}]
  %s1 = inlined_call_operand.hbm [shape: f32[1,2048], index: 1, kind: output, shape index: {}]
  %s2 = sld [smem:[#allocation0]]
  $region18: #{tpu_custom_call.1} parent=0
    _
  %s4 = ssub.s32 1, %s2
  %s5 = scalar_select 0, %s4, %s2
  $region1: #{tpu_custom_call.1} parent=0
    #allocation2 [shape = 'u8[8192]{0}', space=vmem, size = 0x2000, scoped, tag = 'input window, operand 0, single buffered']
    #allocation3 [shape = 's32[1]{0}', space=sflag, size = 0x4, scoped, tag = 'scoped memory for tpu_custom_call.1']
    #allocation4 [shape = 's32[1]{0}', space=sflag, size = 0x4, scoped, tag = 'scoped memory for tpu_custom_call.1']
    #allocation5 [shape = 'u8[8192]{0}', space=vmem, size = 0x2000, scoped, tag = 'output window, operand 0, single buffered']
    %6 = vsyncpa [#allocation3], 0
    %7 = vsyncpa [#allocation4], 0
    // Predicated region
    $region2: #{tpu_custom_call.1} parent=1 // pred_check
      _
    $region3: #{tpu_custom_call.1} parent=1 // pred_check_branch
      %9 = sbr.rel (0) target = $region5
    $region4: #{tpu_custom_call.1} parent=1 // pred_region
      %s11 = ssub.s32 256, 256
      %12 = vsyncadd [#allocation3], %s11
      %s14 = sshll.u32 [#allocation2], 4
      %s15 = int_to_ptr.vmem [resolvable:$true] %s14
      %17 = dma.hbm_to_vmem [thread:$0]  %s0, 256, %s15, [#allocation3]
    $region5: #{tpu_custom_call.1} parent=1 // pred_fallthru
      _
    // Predicated region
    $region6: #{tpu_custom_call.1} parent=1 // pred_check
      _
    $region7: #{tpu_custom_call.1} parent=1 // pred_check_branch
      %19 = sbr.rel (0) target = $region9
    $region8: #{tpu_custom_call.1} parent=1 // pred_region
      %20 = dma.done [#allocation3], 256
    $region9: #{tpu_custom_call.1} parent=1 // pred_fallthru
      _
    %v21 = vld [vmem:[#allocation2] sm:$0xff]
    %v22 = vld [vmem:[#allocation2 + $0x8] sm:$0xff]
    %v23 = vmul.f32 %v21, 0.7
    %v24 = vmul.f32 %v22, 0.7
    %25 = vst [vmem:[#allocation5] sm:$0xff] %v23
    %26 = vst [vmem:[#allocation5 + $0x8] sm:$0xff] %v24
    // Predicated region
    $region10: #{tpu_custom_call.1} parent=1 // pred_check
      _
    $region11: #{tpu_custom_call.1} parent=1 // pred_check_branch
      %28 = sbr.rel (0) target = $region13
    $region12: #{tpu_custom_call.1} parent=1 // pred_region
      %s30 = ssub.s32 256, 256
      %31 = vsyncadd [#allocation4], %s30
      %s33 = sshll.u32 [#allocation5], 4
      %s34 = int_to_ptr.vmem [resolvable:$true] %s33
      %36 = dma.vmem_to_hbm [thread:$0]  %s34, 256, %s1, [#allocation4]
    $region13: #{tpu_custom_call.1} parent=1 // pred_fallthru
      _
    // Predicated region
    $region14: #{tpu_custom_call.1} parent=1 // pred_check
      _
    $region15: #{tpu_custom_call.1} parent=1 // pred_check_branch
      %38 = sbr.rel (0) target = $region17
    $region16: #{tpu_custom_call.1} parent=1 // pred_region
      %39 = dma.done [#allocation4], 256
    $region17: #{tpu_custom_call.1} parent=1 // pred_fallthru
      _
    %40 = vsyncpa [#allocation3], 1
    %41 = vsyncpa [#allocation4], 1

</llo_original>
